<compile_context>
chip_gen: v7x
topology: tpu7x:2x2x1
jax: 0.10.0
libtpu: 0.0.40
codegen_flags: <defaults>
</compile_context>

<pallas_src>
import functools

import jax
import jax.numpy as jnp
from jax import lax
from jax.experimental import pallas as pl
from jax.experimental.pallas import tpu as pltpu

KSIZE = 7
PAD = (KSIZE - 1) // 2

# Use the dense (HW, HW) conv-matrix path only while the (double-buffered) matrix
# stays small relative to VMEM; larger maps use the roll-based tap path.
_CONV_MATMUL_MAX_HW = 1024


# --------------------------------------------------------------------------------------
# In-kernel helpers (operate on values, shared by both kernel variants)
# --------------------------------------------------------------------------------------
def _channel_attn(x, w1t, w2t):
    # x: (Bt, C, HW) in input dtype.  Pool / fc math in f32, elementwise stays in x.dtype.
    x_mean = jnp.mean(x, axis=2, dtype=jnp.float32)                       # (Bt, C)
    x_max = jnp.max(x, axis=2).astype(jnp.float32)                        # (Bt, C)
    pool = 0.5 * (x_mean + x_max)
    h = jnp.maximum(jnp.dot(pool, w1t, preferred_element_type=jnp.float32), 0.0)
    attn_c = jnp.dot(h, w2t, preferred_element_type=jnp.float32)          # (Bt, C)
    gate_c = jax.nn.sigmoid(attn_c).astype(x.dtype)
    return x * gate_c[:, :, None]                                         # (Bt, C, HW)


def _spatial_pool(xc):
    s_mean = jnp.mean(xc, axis=1, dtype=jnp.float32)                      # (Bt, HW)
    s_max = jnp.max(xc, axis=1).astype(jnp.float32)                       # (Bt, HW)
    return 0.5 * (s_mean + s_max)


# --------------------------------------------------------------------------------------
# Kernels
# --------------------------------------------------------------------------------------
def light_cbam_kernel_matmul(x_ref, w1t_ref, w2t_ref, convmat_ref, cb_ref, o_ref):
    # convmat_ref: (HW, HW) dense 7x7 "same"-conv matrix with the BN scale folded in and
    # border masking baked into the zeros.  cb_ref: (1,) folded BN bias in SMEM.
    x = x_ref[...]                                                         # (Bt, C, HW)
    xc = _channel_attn(x, w1t_ref[...], w2t_ref[...])                      # (Bt, C, HW)
    s = _spatial_pool(xc)                                                  # (Bt, HW) f32
    y = jnp.dot(s, convmat_ref[...], preferred_element_type=jnp.float32) + cb_ref[0]
    gate_s = jax.nn.sigmoid(y).astype(xc.dtype)                            # (Bt, HW)
    o_ref[...] = (xc * gate_s[:, None, :]).astype(o_ref.dtype)


def light_cbam_kernel_roll(x_ref, w1t_ref, w2t_ref, mw_ref, cb_ref, o_ref, *, H, W):
    # mw_ref: (49, HW) per-tap weight rows, pre-multiplied by the border mask (so the
    # kernel needs no iota / compares / selects).  Tap (r, c) is a lane rotation (XLU).
    HW = H * W
    x = x_ref[...]
    xc = _channel_attn(x, w1t_ref[...], w2t_ref[...])
    s = _spatial_pool(xc)                                                  # (Bt, HW) f32
    acc = jnp.zeros_like(s)
    for r in range(-PAD, PAD + 1):
        for c in range(-PAD, PAD + 1):
            d = r * W + c
            k = (r + PAD) * KSIZE + (c + PAD)
            shifted = pltpu.roll(s, shift=(-d) % HW, axis=1) if (d % HW) != 0 else s
            acc = acc + mw_ref[k][None, :] * shifted
    gate_s = jax.nn.sigmoid(acc + cb_ref[0]).astype(xc.dtype)
    o_ref[...] = (xc * gate_s[:, None, :]).astype(o_ref.dtype)


# --------------------------------------------------------------------------------------
# Host-side constant construction
# --------------------------------------------------------------------------------------
def _build_conv_matrix(conv_w_eff, H, W):
    """Dense (HW, HW) matrix M with y = s @ M equal to a 7x7 zero-padded cross-correlation."""
    HW = H * W
    idx = jnp.arange(HW)
    i_out = idx // W
    j_out = idx % W
    M = jnp.zeros((HW, HW), jnp.float32)
    for r in range(-PAD, PAD + 1):
        for c in range(-PAD, PAD + 1):
            i_in = i_out + r
            j_in = j_out + c
            valid = (i_in >= 0) & (i_in < H) & (j_in >= 0) & (j_in < W)
            p = jnp.clip(i_in, 0, H - 1) * W + jnp.clip(j_in, 0, W - 1)
            w = conv_w_eff[r + PAD, c + PAD]
            M = M.at[p, idx].add(jnp.where(valid, w, 0.0))
    return M


def _build_tap_weights(conv_w_eff, H, W):
    """(49, HW) per-tap weights with the zero-padding border mask folded in."""
    idx = jnp.arange(H * W)
    i_out = idx // W
    j_out = idx % W
    rows = []
    for r in range(-PAD, PAD + 1):
        for c in range(-PAD, PAD + 1):
            valid = ((i_out + r >= 0) & (i_out + r < H) &
                     (j_out + c >= 0) & (j_out + c < W))
            rows.append(jnp.where(valid, conv_w_eff[r + PAD, c + PAD], 0.0))
    return jnp.stack(rows).astype(jnp.float32)


# --------------------------------------------------------------------------------------
# Tiling / VMEM budgeting
# --------------------------------------------------------------------------------------
def _tpu_chip_info():
    """(vmem_capacity_bytes, tensorcores_per_chip), with conservative fallbacks."""
    vmem = 64 << 20          # conservative default (v7x)
    cores = 1
    try:
        info = pltpu.get_tpu_info()
        vmem = int(getattr(info, "vmem_capacity_bytes", vmem) or vmem)
        for attr in ("tensorcores_per_chip", "num_cores", "cores_per_chip", "core_count"):
            v = getattr(info, attr, None)
            if v:
                cores = int(v)
                break
    except Exception:
        pass
    try:
        v = getattr(jax.devices()[0], "num_cores", None)
        if v:
            cores = max(cores, int(v))
    except Exception:
        pass
    return vmem, cores


def _pick_batch_tile(n, bt_cap, cores_per_chip):
    """Pick the per-step batch tile Bt and the (possibly padded) batch N_pad."""
    bt_cap = max(1, min(int(bt_cap), n))
    fits = [d for d in range(1, n + 1) if n % d == 0 and d <= bt_cap]
    bt = max(fits)
    # Awkward batch sizes (e.g. prime N): pad the batch instead of collapsing to blocks
    # far below the VMEM-feasible size.
    if 2 * bt < bt_cap:
        bt = bt_cap
    if cores_per_chip >= 2:
        steps = -(-n // bt)
        if steps % 2 == 1:
            # Prefer an even (>=2) step count so both TensorCores get equal work.
            even = [d for d in fits if (n // d) % 2 == 0 and 2 * d >= bt]
            if even:
                bt = max(even)
            elif bt > 1:
                bt = -(-bt // 2)
    n_pad = -(-n // bt) * bt
    return bt, n_pad


# --------------------------------------------------------------------------------------
# Public wrapper
# --------------------------------------------------------------------------------------
def light_cbam(x, w1, w2, conv_w, bn_gamma, bn_beta, bn_mean, bn_var, bn_eps=1e-5):
    """x: (N, C, H, W);  w1: (Cr, C) fc1 weight;  w2: (C, Cr) fc2 weight;
    conv_w: (7, 7) spatial conv weight;  bn_*: scalar BatchNorm2d(1) params (eval mode)."""
    N, C, H, W = x.shape
    Cr = w1.shape[0]
    HW = H * W

    # Fold eval-mode BatchNorm into the bias-free 7x7 conv (exact linear fold).
    scale = bn_gamma / jnp.sqrt(bn_var + bn_eps)
    cw_eff = (conv_w * scale).astype(jnp.float32)                          # (7, 7)
    cb_eff = jnp.reshape(bn_beta - bn_mean * scale, (1,)).astype(jnp.float32)

    w1t = jnp.transpose(w1).astype(jnp.float32)                            # (C, Cr)
    w2t = jnp.transpose(w2).astype(jnp.float32)                            # (Cr, C)

    use_matmul = HW <= _CONV_MATMUL_MAX_HW
    if use_matmul:
        conv_const = _build_conv_matrix(cw_eff, H, W)                      # (HW, HW)
        conv_spec = pl.BlockSpec((HW, HW), lambda b: (0, 0))
        kernel = light_cbam_kernel_matmul
        const_bytes = 2 * HW * HW * 4
    else:
        conv_const = _build_tap_weights(cw_eff, H, W)                      # (49, HW)
        conv_spec = pl.BlockSpec((KSIZE * KSIZE, HW), lambda b: (0, 0))
        kernel = functools.partial(light_cbam_kernel_roll, H=H, W=W)
        const_bytes = 2 * KSIZE * KSIZE * HW * 4

    # ---- block-size / VMEM budgeting (generation aware) ----
    vmem_cap, cores = _tpu_chip_info()
    vmem_budget = int(vmem_cap * 3 // 4)          # headroom for compiler internal scratch
    itemsize = jnp.dtype(x.dtype).itemsize
    per_image = C * HW * itemsize
    # 2x double-buffered input block + 2x output block + ~2x in-kernel temporaries.
    per_step = 6 * per_image
    extras = const_bytes + 4 * (C * Cr * 4) + (2 << 20)
    bt_cap = max(1, (vmem_budget - extras) // per_step)
    Bt, N_pad = _pick_batch_tile(N, bt_cap, cores)

    x_flat = x.reshape(N, C, HW)                                           # lane-dense HW
    if N_pad != N:
        x_flat = jnp.concatenate(
            [x_flat, jnp.zeros((N_pad - N, C, HW), x.dtype)], axis=0)

    grid = (N_pad // Bt,)
    vmem_limit = int(min(vmem_budget, max(32 << 20, per_step * Bt + extras)))

    out_flat = pl.pallas_call(
        kernel,
        out_shape=jax.ShapeDtypeStruct((N_pad, C, HW), x.dtype),
        grid_spec=pltpu.PrefetchScalarGridSpec(
            num_scalar_prefetch=0,
            grid=grid,
            in_specs=[
                pl.BlockSpec((Bt, C, HW), lambda b: (b, 0, 0)),
                pl.BlockSpec((C, Cr), lambda b: (0, 0)),
                pl.BlockSpec((Cr, C), lambda b: (0, 0)),
                conv_spec,
                pl.BlockSpec(memory_space=pltpu.MemorySpace.SMEM),
            ],
            out_specs=pl.BlockSpec((Bt, C, HW), lambda b: (b, 0, 0)),
        ),
        compiler_params=pltpu.CompilerParams(
            dimension_semantics=("parallel",),
            vmem_limit_bytes=vmem_limit,
        ),
    )(x_flat, w1t, w2t, conv_const, cb_eff)

    return out_flat[:N].reshape(N, C, H, W)


# --------------------------------------------------------------------------------------
# Pure-JAX reference (eval-mode BN), mirrors the PyTorch forward
# --------------------------------------------------------------------------------------
def reference(x, w1, w2, conv_w, gamma, beta, mean, var, eps=1e-5):
    pool = 0.5 * x.mean((2, 3), keepdims=True) + 0.5 * x.max((2, 3), keepdims=True)
    h = jnp.maximum(jnp.einsum('rc,ncij->nrij', w1, pool), 0.0)
    attn = jnp.einsum('cr,nrij->ncij', w2, h)
    xc = x * jax.nn.sigmoid(attn)
    s = 0.5 * xc.mean(1, keepdims=True) + 0.5 * xc.max(1, keepdims=True)
    y = lax.conv_general_dilated(
        s, conv_w.reshape(1, 1, KSIZE, KSIZE), (1, 1), ((PAD, PAD), (PAD, PAD)),
        dimension_numbers=('NCHW', 'OIHW', 'NCHW'))
    scale = gamma / jnp.sqrt(var + eps)
    y = y * scale + (beta - mean * scale)
    return xc * jax.nn.sigmoid(y)


if __name__ == "__main__":
    key = jax.random.PRNGKey(0)
    kx, k1, k2, k3 = jax.random.split(key, 4)

    N, C, H, W = 2, 32, 16, 16
    reduction = 16
    Cr = C // reduction

    x = jax.random.normal(kx, (N, C, H, W), jnp.float32)
    # fc1: Conv2d(C, C//r, 1, bias=False) -> weight (Cr, C); fc2: (C, Cr)
    w1 = jax.random.normal(k1, (Cr, C), jnp.float32) * 0.1
    w2 = jax.random.normal(k2, (C, Cr), jnp.float32) * 0.1
    # spatial ConvBnAct: Conv2d(1, 1, 7, padding=3, bias=False) + BatchNorm2d(1)
    conv_w = jax.random.normal(k3, (KSIZE, KSIZE), jnp.float32) * 0.1
    bn_gamma = jnp.float32(0.9)
    bn_beta = jnp.float32(0.1)
    bn_mean = jnp.float32(0.05)
    bn_var = jnp.float32(1.2)

    out = light_cbam(x, w1, w2, conv_w, bn_gamma, bn_beta, bn_mean, bn_var)
    out = jax.block_until_ready(out)

    ref = reference(x, w1, w2, conv_w, bn_gamma, bn_beta, bn_mean, bn_var)
    assert out.shape == (N, C, H, W)
    # Tolerance accounts for MXU f32 matmuls (conv-as-matmul / reference conv) possibly
    # using bf16 passes at default precision.
    err = float(jnp.max(jnp.abs(out - ref)))
    assert jnp.allclose(out, ref, atol=2e-3, rtol=2e-3), err

    print("KERNEL_OK")
</pallas_src>

<mosaic_0001>
module attributes {stable_mosaic.version = 11 : i64} {
  func.func @light_cbam_kernel_matmul(%arg0: i32, %arg1: memref<2x32x256xf32, #tpu.memory_space<vmem>>, %arg2: memref<32x2xf32, #tpu.memory_space<vmem>>, %arg3: memref<2x32xf32, #tpu.memory_space<vmem>>, %arg4: memref<256x256xf32, #tpu.memory_space<vmem>>, %arg5: memref<1xf32, #tpu.memory_space<smem>>, %arg6: memref<2x32x256xf32, #tpu.memory_space<vmem>>) attributes {dimension_semantics = [#tpu.dimension_semantics<parallel>], iteration_bounds = array<i64: 1>, scalar_prefetch = 0 : i64, scratch_operands = 0 : i64, tpu.core_type = #tpu.core_type<tc>, window_params = [{transform_indices = @transform_0, window_bounds = array<i64: 2, 32, 256>}, {pipeline_mode = #tpu.pipeline_mode<synchronous>, transform_indices = @transform_1, window_bounds = array<i64: 32, 2>}, {pipeline_mode = #tpu.pipeline_mode<synchronous>, transform_indices = @transform_2, window_bounds = array<i64: 2, 32>}, {pipeline_mode = #tpu.pipeline_mode<synchronous>, transform_indices = @transform_3, window_bounds = array<i64: 256, 256>}, {transform_indices = @transform_4, window_bounds = array<i64: 1>}, {transform_indices = @transform_5, window_bounds = array<i64: 2, 32, 256>}]} {
    %c0 = arith.constant 0 : index
    %c0_0 = arith.constant 0 : index
    %c0_1 = arith.constant 0 : index
    %0 = vector.load %arg1[%c0, %c0_0, %c0_1] : memref<2x32x256xf32, #tpu.memory_space<vmem>>, vector<2x32x256xf32>
    %c0_2 = arith.constant 0 : index
    %c0_3 = arith.constant 0 : index
    %1 = vector.load %arg2[%c0_2, %c0_3] : memref<32x2xf32, #tpu.memory_space<vmem>>, vector<32x2xf32>
    %c0_4 = arith.constant 0 : index
    %c0_5 = arith.constant 0 : index
    %2 = vector.load %arg3[%c0_4, %c0_5] : memref<2x32xf32, #tpu.memory_space<vmem>>, vector<2x32xf32>
    %cst = arith.constant dense<0.000000e+00> : vector<2x32xf32>
    %3 = vector.multi_reduction <add>, %0, %cst [2] : vector<2x32x256xf32> to vector<2x32xf32>
    %cst_6 = arith.constant 2.560000e+02 : f32
    %4 = vector.broadcast %cst_6 : f32 to vector<2x32xf32>
    %5 = arith.divf %3, %4 : vector<2x32xf32>
    %cst_7 = arith.constant dense<0xFF800000> : vector<2x32xf32>
    %6 = vector.multi_reduction <maximumf>, %0, %cst_7 [2] : vector<2x32x256xf32> to vector<2x32xf32>
    %7 = arith.addf %5, %6 : vector<2x32xf32>
    %cst_8 = arith.constant 5.000000e-01 : f32
    %8 = vector.broadcast %cst_8 : f32 to vector<2x32xf32>
    %9 = arith.mulf %8, %7 : vector<2x32xf32>
    %cst_9 = arith.constant dense<0.000000e+00> : vector<2x2xf32>
    %10 = tpu.matmul %9, %1, %cst_9 {dimension_numbers = #tpu.dot_dimension_numbers<[1], [0], [0], [1], [0, 0, 1, 1], [], []>} : vector<2x32xf32>, vector<32x2xf32>, vector<2x2xf32> -> vector<2x2xf32>
    %cst_10 = arith.constant 0.000000e+00 : f32
    %11 = vector.broadcast %cst_10 : f32 to vector<2x2xf32>
    %12 = arith.maximumf %10, %11 : vector<2x2xf32>
    %cst_11 = arith.constant dense<0.000000e+00> : vector<2x32xf32>
    %13 = tpu.matmul %12, %2, %cst_11 {dimension_numbers = #tpu.dot_dimension_numbers<[1], [0], [0], [1], [0, 0, 1, 1], [], []>} : vector<2x2xf32>, vector<2x32xf32>, vector<2x32xf32> -> vector<2x32xf32>
    %14 = arith.negf %13 : vector<2x32xf32>
    %15 = math.exp %14 : vector<2x32xf32>
    %cst_12 = arith.constant 1.000000e+00 : f32
    %16 = vector.broadcast %cst_12 : f32 to vector<2x32xf32>
    %17 = arith.addf %16, %15 : vector<2x32xf32>
    %18 = arith.divf %16, %17 : vector<2x32xf32>
    %19 = vector.shape_cast %18 : vector<2x32xf32> to vector<2x32x1xf32>
    %20 = vector.broadcast %19 : vector<2x32x1xf32> to vector<2x32x256xf32>
    %21 = arith.mulf %0, %20 : vector<2x32x256xf32>
    %cst_13 = arith.constant dense<0.000000e+00> : vector<2x256xf32>
    %22 = vector.multi_reduction <add>, %21, %cst_13 [1] : vector<2x32x256xf32> to vector<2x256xf32>
    %cst_14 = arith.constant 3.200000e+01 : f32
    %23 = vector.broadcast %cst_14 : f32 to vector<2x256xf32>
    %24 = arith.divf %22, %23 : vector<2x256xf32>
    %cst_15 = arith.constant dense<0xFF800000> : vector<2x256xf32>
    %25 = vector.multi_reduction <maximumf>, %21, %cst_15 [1] : vector<2x32x256xf32> to vector<2x256xf32>
    %26 = arith.addf %24, %25 : vector<2x256xf32>
    %cst_16 = arith.constant 5.000000e-01 : f32
    %27 = vector.broadcast %cst_16 : f32 to vector<2x256xf32>
    %28 = arith.mulf %27, %26 : vector<2x256xf32>
    %c0_17 = arith.constant 0 : index
    %c0_18 = arith.constant 0 : index
    %29 = vector.load %arg4[%c0_17, %c0_18] : memref<256x256xf32, #tpu.memory_space<vmem>>, vector<256x256xf32>
    %cst_19 = arith.constant dense<0.000000e+00> : vector<2x256xf32>
    %30 = tpu.matmul %28, %29, %cst_19 {dimension_numbers = #tpu.dot_dimension_numbers<[1], [0], [0], [1], [0, 0, 1, 1], [], []>} : vector<2x256xf32>, vector<256x256xf32>, vector<2x256xf32> -> vector<2x256xf32>
    %c0_20 = arith.constant 0 : index
    %31 = memref.load %arg5[%c0_20] : memref<1xf32, #tpu.memory_space<smem>>
    %32 = vector.broadcast %31 : f32 to vector<2x256xf32>
    %33 = arith.addf %30, %32 : vector<2x256xf32>
    %34 = arith.negf %33 : vector<2x256xf32>
    %35 = math.exp %34 : vector<2x256xf32>
    %cst_21 = arith.constant 1.000000e+00 : f32
    %36 = vector.broadcast %cst_21 : f32 to vector<2x256xf32>
    %37 = arith.addf %36, %35 : vector<2x256xf32>
    %38 = arith.divf %36, %37 : vector<2x256xf32>
    %39 = vector.shape_cast %38 : vector<2x256xf32> to vector<2x1x256xf32>
    %40 = vector.broadcast %39 : vector<2x1x256xf32> to vector<2x32x256xf32>
    %41 = arith.mulf %21, %40 : vector<2x32x256xf32>
    %c0_22 = arith.constant 0 : index
    %c0_23 = arith.constant 0 : index
    %c0_24 = arith.constant 0 : index
    %42 = vector.load %arg6[%c0_22, %c0_23, %c0_24] : memref<2x32x256xf32, #tpu.memory_space<vmem>>, vector<2x32x256xf32>
    tpu.vector_store %arg6[%c0_22, %c0_23, %c0_24], %41 {strides = array<i32>} : memref<2x32x256xf32, #tpu.memory_space<vmem>>, vector<2x32x256xf32>,
    return
  }
  func.func @transform_0(%arg0: i32) -> (i32, i32, i32) {
    %c0_i32 = arith.constant 0 : i32
    %c0_i32_0 = arith.constant 0 : i32
    %c0_i32_1 = arith.constant 0 : i32
    return %arg0, %c0_i32, %c0_i32_0 : i32, i32, i32
  }
  func.func @transform_1(%arg0: i32) -> (i32, i32) {
    %c0_i32 = arith.constant 0 : i32
    %c0_i32_0 = arith.constant 0 : i32
    %c0_i32_1 = arith.constant 0 : i32
    return %c0_i32, %c0_i32_0 : i32, i32
  }
  func.func @transform_2(%arg0: i32) -> (i32, i32) {
    %c0_i32 = arith.constant 0 : i32
    %c0_i32_0 = arith.constant 0 : i32
    %c0_i32_1 = arith.constant 0 : i32
    return %c0_i32, %c0_i32_0 : i32, i32
  }
  func.func @transform_3(%arg0: i32) -> (i32, i32) {
    %c0_i32 = arith.constant 0 : i32
    %c0_i32_0 = arith.constant 0 : i32
    %c0_i32_1 = arith.constant 0 : i32
    return %c0_i32, %c0_i32_0 : i32, i32
  }
  func.func @transform_4(%arg0: i32) -> i32 {
    %c0_i32 = arith.constant 0 : i32
    %c0_i32_0 = arith.constant 0 : i32
    return %c0_i32 : i32
  }
  func.func @transform_5(%arg0: i32) -> (i32, i32, i32) {
    %c0_i32 = arith.constant 0 : i32
    %c0_i32_0 = arith.constant 0 : i32
    %c0_i32_1 = arith.constant 0 : i32
    return %arg0, %c0_i32, %c0_i32_0 : i32, i32, i32
  }
}

</mosaic_0001>

<llo_original>
// kernel: tpu_custom_call.1
$region0: #{tpu_custom_call.1}
  #allocation0 [shape = 'u32[]', space=smem, size = 0x4, offset = 0x4, fixed_abs, tag = 'smem constant byte address 0x4 - core index']
  #allocation1 [shape = 'u32[144,128]{1,0:T(1,128)}', space=vmem, size = 0x12000, scoped, tag = 'internal scratch']
  #allocation2 [shape = 'f32[1]{0:T(128)S(6)}', space=smem, size = 0x200, scoped, tag = 'scoped memory for tpu_custom_call.1']
  %s0 = inlined_call_operand.hbm [shape: f32[2,32,256], index: 0, kind: input, shape index: {}]
  %s1 = inlined_call_operand.vmem [shape: f32[32,2], index: 1, kind: input, shape index: {}]
  %s2 = inlined_call_operand.vmem [shape: f32[2,32], index: 2, kind: input, shape index: {}]
  %s3 = inlined_call_operand.hbm [shape: f32[256,256], index: 3, kind: input, shape index: {}]
  %s4 = inlined_call_operand.<no memory space> [shape: f32[1], index: 4, kind: input, shape index: {}]
  %s5 = inlined_call_operand.hbm [shape: f32[2,32,256], index: 5, kind: output, shape index: {}]
  %s6 = sld [smem:[#allocation0]]
  $region38: #{tpu_custom_call.1} parent=0
    _
  %s8 = ssub.s32 1, %s6
  %s9 = scalar_select 0, %s8, %s6
  %10 = sst [smem:[#allocation2]] %s4
  $region1: #{tpu_custom_call.1} parent=0
    #allocation3 [shape = 'u8[65536]{0}', space=vmem, size = 0x10000, scoped, tag = 'input window, operand 0, single buffered']
    #allocation4 [shape = 's32[1]{0}', space=sflag, size = 0x4, scoped, tag = 'scoped memory for tpu_custom_call.1']
    #allocation5 [shape = 's32[1]{0}', space=sflag, size = 0x4, scoped, tag = 'scoped memory for tpu_custom_call.1']
    #allocation6 [shape = 'u8[262144]{0}', space=vmem, size = 0x40000, scoped, tag = 'input window, operand 3, single buffered']
    #allocation7 [shape = 's32[1]{0}', space=sflag, size = 0x4, scoped, tag = 'scoped memory for tpu_custom_call.1']
    #allocation8 [shape = 'u8[65536]{0}', space=vmem, size = 0x10000, scoped, tag = 'output window, operand 0, single buffered']
    %11 = vsyncpa [#allocation4], 0
    %12 = vsyncpa [#allocation7], 0
    %13 = vsyncpa [#allocation5], 0
    // Predicated region
    $region2: #{tpu_custom_call.1} parent=1 // pred_check
      _
    $region3: #{tpu_custom_call.1} parent=1 // pred_check_branch
      %15 = sbr.rel (0) target = $region5
    $region4: #{tpu_custom_call.1} parent=1 // pred_region
      %s17 = ssub.s32 2048, 2048
      %18 = vsyncadd [#allocation4], %s17
      %s19 = sshll.u32 [#allocation3], 4
      %s20 = int_to_ptr.vmem [resolvable:$true] %s19
      %25 = dma.hbm_to_vmem [thread:$0]  %s0, 2048, %s20, [#allocation4], 256, 256, 16
    $region5: #{tpu_custom_call.1} parent=1 // pred_fallthru
      _
    // Predicated region
    $region6: #{tpu_custom_call.1} parent=1 // pred_check
      _
    $region7: #{tpu_custom_call.1} parent=1 // pred_check_branch
      %27 = sbr.rel (0) target = $region9
    $region8: #{tpu_custom_call.1} parent=1 // pred_region
      _
    $region9: #{tpu_custom_call.1} parent=1 // pred_fallthru
      _
    // Predicated region
    $region10: #{tpu_custom_call.1} parent=1 // pred_check
      _
    $region11: #{tpu_custom_call.1} parent=1 // pred_check_branch
      %29 = sbr.rel (0) target = $region13
    $region12: #{tpu_custom_call.1} parent=1 // pred_region
      _
    $region13: #{tpu_custom_call.1} parent=1 // pred_fallthru
      _
    // Predicated region
    $region14: #{tpu_custom_call.1} parent=1 // pred_check
      _
    $region15: #{tpu_custom_call.1} parent=1 // pred_check_branch
      %31 = sbr.rel (0) target = $region17
    $region16: #{tpu_custom_call.1} parent=1 // pred_region
      %s33 = ssub.s32 8192, 8192
      %34 = vsyncadd [#allocation7], %s33
      %s35 = sshll.u32 [#allocation6], 4
      %s36 = int_to_ptr.vmem [resolvable:$true] %s35
      %41 = dma.hbm_to_vmem [thread:$0]  %s3, 8192, %s36, [#allocation7], 256, 256, 16
    $region17: #{tpu_custom_call.1} parent=1 // pred_fallthru
      _
    // Predicated region
    $region18: #{tpu_custom_call.1} parent=1 // pred_check
      _
    $region19: #{tpu_custom_call.1} parent=1 // pred_check_branch
      %43 = sbr.rel (0) target = $region21
    $region20: #{tpu_custom_call.1} parent=1 // pred_region
      _
    $region21: #{tpu_custom_call.1} parent=1 // pred_fallthru
      _
    // Predicated region
    $region22: #{tpu_custom_call.1} parent=1 // pred_check
      _
    $region23: #{tpu_custom_call.1} parent=1 // pred_check_branch
      %45 = sbr.rel (0) target = $region25
    $region24: #{tpu_custom_call.1} parent=1 // pred_region
      %46 = dma.done [#allocation4], 2048
    $region25: #{tpu_custom_call.1} parent=1 // pred_fallthru
      _
    // Predicated region
    $region26: #{tpu_custom_call.1} parent=1 // pred_check
      _
    $region27: #{tpu_custom_call.1} parent=1 // pred_check_branch
      %48 = sbr.rel (0) target = $region29
    $region28: #{tpu_custom_call.1} parent=1 // pred_region
      %49 = dma.done [#allocation7], 8192
    $region29: #{tpu_custom_call.1} parent=1 // pred_fallthru
      _
    %v50 = vld [vmem:[#allocation3] sm:$0xff]
    %v51 = vld [vmem:[#allocation3 + $0x8] sm:$0xff]
    %v52 = vld [vmem:[#allocation3 + $0x10] sm:$0xff]
    %v53 = vld [vmem:[#allocation3 + $0x18] sm:$0xff]
    %v54 = vld [vmem:[#allocation3 + $0x20] sm:$0xff]
    %v55 = vld [vmem:[#allocation3 + $0x28] sm:$0xff]
    %v56 = vld [vmem:[#allocation3 + $0x30] sm:$0xff]
    %v57 = vld [vmem:[#allocation3 + $0x38] sm:$0xff]
    %v58 = vld [vmem:[#allocation3 + $0x40] sm:$0xff]
    %v59 = vld [vmem:[#allocation3 + $0x48] sm:$0xff]
    %v60 = vld [vmem:[#allocation3 + $0x50] sm:$0xff]
    %v61 = vld [vmem:[#allocation3 + $0x58] sm:$0xff]
    %v62 = vld [vmem:[#allocation3 + $0x60] sm:$0xff]
    %v63 = vld [vmem:[#allocation3 + $0x68] sm:$0xff]
    %v64 = vld [vmem:[#allocation3 + $0x70] sm:$0xff]
    %v65 = vld [vmem:[#allocation3 + $0x78] sm:$0xff]
    %v66 = vld [vmem:[%s1] sm:$0xff]
    %v67 = vld [vmem:[%s1 + $0x8] sm:$0xff]
    %v68 = vld [vmem:[%s1 + $0x10] sm:$0xff]
    %v69 = vld [vmem:[%s1 + $0x18] sm:$0xff]
    %v70 = vld [vmem:[%s2] sm:$0x3]
    %v71 = vadd.f32 %v50, %v51
    %72 = vadd.xlane.f32.xlu0 %v71
    %v73 = vpop.xlane.xlu0 %72
    %v74 = vadd.f32 %v52, %v53
    %75 = vadd.xlane.f32.xlu0 %v74
    %v76 = vpop.xlane.xlu0 %75
    %v77 = vadd.f32 %v54, %v55
    %78 = vadd.xlane.f32.xlu0 %v77
    %v79 = vpop.xlane.xlu0 %78
    %v80 = vadd.f32 %v56, %v57
    %81 = vadd.xlane.f32.xlu0 %v80
    %v82 = vpop.xlane.xlu0 %81
    %v83 = vadd.f32 %v58, %v59
    %84 = vadd.xlane.f32.xlu0 %v83
    %v85 = vpop.xlane.xlu0 %84
    %v86 = vadd.f32 %v60, %v61
    %87 = vadd.xlane.f32.xlu0 %v86
    %v88 = vpop.xlane.xlu0 %87
    %v89 = vadd.f32 %v62, %v63
    %90 = vadd.xlane.f32.xlu0 %v89
    %v91 = vpop.xlane.xlu0 %90
    %v92 = vadd.f32 %v64, %v65
    %93 = vadd.xlane.f32.xlu0 %v92
    %v94 = vpop.xlane.xlu0 %93
    %v95 = vrcp.pop 256.0
    %v96 = vmul.f32 %v73, %v95
    %v97 = vmul.f32 %v76, %v95
    %v98 = vmul.f32 %v79, %v95
    %v99 = vmul.f32 %v82, %v95
    %v100 = vmul.f32 %v85, %v95
    %v101 = vmul.f32 %v88, %v95
    %v102 = vmul.f32 %v91, %v95
    %v103 = vmul.f32 %v94, %v95
    %v104 = vmax.f32 %v50, %v51
    %105 = vmax.xlane.f32.xlu0 %v104
    %v106 = vpop.xlane.xlu0 %105
    %v107 = vmax.f32 %v52, %v53
    %108 = vmax.xlane.f32.xlu0 %v107
    %v109 = vpop.xlane.xlu0 %108
    %v110 = vmax.f32 %v54, %v55
    %111 = vmax.xlane.f32.xlu0 %v110
    %v112 = vpop.xlane.xlu0 %111
    %v113 = vmax.f32 %v56, %v57
    %114 = vmax.xlane.f32.xlu0 %v113
    %v115 = vpop.xlane.xlu0 %114
    %v116 = vmax.f32 %v58, %v59
    %117 = vmax.xlane.f32.xlu0 %v116
    %v118 = vpop.xlane.xlu0 %117
    %v119 = vmax.f32 %v60, %v61
    %120 = vmax.xlane.f32.xlu0 %v119
    %v121 = vpop.xlane.xlu0 %120
    %v122 = vmax.f32 %v62, %v63
    %123 = vmax.xlane.f32.xlu0 %v122
    %v124 = vpop.xlane.xlu0 %123
    %v125 = vmax.f32 %v64, %v65
    %126 = vmax.xlane.f32.xlu0 %v125
    %v127 = vpop.xlane.xlu0 %126
    %v128 = vadd.f32 %v96, %v106
    %v129 = vadd.f32 %v97, %v109
    %v130 = vadd.f32 %v98, %v112
    %v131 = vadd.f32 %v99, %v115
    %v132 = vadd.f32 %v100, %v118
    %v133 = vadd.f32 %v101, %v121
    %v134 = vadd.f32 %v102, %v124
    %v135 = vadd.f32 %v103, %v127
    %v136 = vmul.f32 %v128, 0.5
    %v137 = vmul.f32 %v129, 0.5
    %v138 = vmul.f32 %v130, 0.5
    %v139 = vmul.f32 %v131, 0.5
    %v140 = vmul.f32 %v132, 0.5
    %v141 = vmul.f32 %v133, 0.5
    %v142 = vmul.f32 %v134, 0.5
    %v143 = vmul.f32 %v135, 0.5
    %v152 = vlaneseq
    %v153 = vand.u32 %v152, 127
    %v154 = vlaneseq
    %v155 = vshrl.u32 %v154, 7
    %v156 = vsub.s32 %v153, %v155
    %v157 = vrot.slane %v136, %v156
    %v158 = vadd.s32 %v153, 4294967288
    %v159 = vlaneseq
    %v160 = vshrl.u32 %v159, 7
    %v161 = vsub.s32 %v158, %v160
    %v162 = vrot.slane %v137, %v161
    %vm163 = vcmask 130112
    %v164 = vsel %vm163, %v162, %v157
    %v165 = vadd.s32 %v153, 4294967280
    %v166 = vlaneseq
    %v167 = vshrl.u32 %v166, 7
    %v168 = vsub.s32 %v165, %v167
    %v169 = vrot.slane %v138, %v168
    %vm170 = vcmask 195712
    %v171 = vsel %vm170, %v169, %v164
    %v172 = vadd.s32 %v153, 4294967272
    %v173 = vlaneseq
    %v174 = vshrl.u32 %v173, 7
    %v175 = vsub.s32 %v172, %v174
    %v176 = vrot.slane %v139, %v175
    %vm177 = vcmask 261312
    %v178 = vsel %vm177, %v176, %v171
    %v179 = vlaneseq
    %v180 = vshrl.u32 %v179, 7
    %v181 = vsub.s32 %v153, %v180
    %v182 = vrot.slane %v140, %v181
    %v183 = vlaneseq
    %v184 = vshrl.u32 %v183, 7
    %v185 = vsub.s32 %v158, %v184
    %v186 = vrot.slane %v141, %v185
    %v187 = vsel %vm163, %v186, %v182
    %v188 = vlaneseq
    %v189 = vshrl.u32 %v188, 7
    %v190 = vsub.s32 %v165, %v189
    %v191 = vrot.slane %v142, %v190
    %v192 = vsel %vm170, %v191, %v187
    %v193 = vlaneseq
    %v194 = vshrl.u32 %v193, 7
    %v195 = vsub.s32 %v172, %v194
    %v196 = vrot.slane %v143, %v195
    %v197 = vsel %vm177, %v196, %v192
    %vm198 = vcmask 1041409
    %v199 = vsel %vm198, %v197, %v178
    %vm200 = vcmask 261120
    %v201 = vsel %vm200, %v199, 0
    %203 = vmatprep.subr.mxu0 0.0
    %204 = vmatpush1.msra.mxu0 %v66
    %205 = vmatprep.subr.mxu0 0.0
    %206 = vmatpush1.msra.mxu0 %v67
    %207 = vmatprep.subr.mxu0 0.0
    %208 = vmatpush1.msra.mxu0 %v68
    %209 = vmatprep.subr.mxu0 0.0
    %210 = vmatpush1.msra.mxu0 %v69
    %211 = vmatprep.subr.mxu0 0.0
    %212 = vmatpush1.msra.mxu0 0.0
    %213 = vmatprep.subr.mxu0 0.0
    %214 = vmatpush1.msra.mxu0 0.0
    %215 = vmatprep.subr.mxu0 0.0
    %216 = vmatpush1.msra.mxu0 0.0
    %217 = vmatprep.subr.mxu0 0.0
    %218 = vmatpush1.msra.mxu0 0.0
    %219 = vmatprep.subr.mxu0 0.0
    %220 = vmatpush1.msra.mxu0 0.0
    %221 = vmatprep.subr.mxu0 0.0
    %222 = vmatpush1.msra.mxu0 0.0
    %223 = vmatprep.subr.mxu0 0.0
    %224 = vmatpush1.msra.mxu0 0.0
    %225 = vmatprep.subr.mxu0 0.0
    %226 = vmatpush1.msra.mxu0 0.0
    %227 = vmatprep.subr.mxu0 0.0
    %228 = vmatpush1.msra.mxu0 0.0
    %229 = vmatprep.subr.mxu0 0.0
    %230 = vmatpush1.msra.mxu0 0.0
    %231 = vmatprep.subr.mxu0 0.0
    %232 = vmatpush1.msra.mxu0 0.0
    %233 = vmatprep.subr.mxu0 0.0
    %234 = vmatpush1.msra.mxu0 0.0
    %235 = vmatprep.subr.mxu0 0.0
    %236 = vmatpush1.msra.mxu0 0.0
    %237 = vmatprep.subr.mxu0 0.0
    %238 = vmatpush1.msra.mxu0 0.0
    %239 = vmatprep.subr.mxu0 0.0
    %240 = vmatpush1.msra.mxu0 0.0
    %241 = vmatprep.subr.mxu0 0.0
    %242 = vmatpush1.msra.mxu0 0.0
    %243 = vmatprep.subr.mxu0 0.0
    %244 = vmatpush1.msra.mxu0 0.0
    %245 = vmatprep.subr.mxu0 0.0
    %246 = vmatpush1.msra.mxu0 0.0
    %247 = vmatprep.subr.mxu0 0.0
    %248 = vmatpush1.msra.mxu0 0.0
    %249 = vmatprep.subr.mxu0 0.0
    %250 = vmatpush1.msra.mxu0 0.0
    %251 = vmatprep.subr.mxu0 0.0
    %252 = vmatpush1.msra.mxu0 0.0
    %253 = vmatprep.subr.mxu0 0.0
    %254 = vmatpush1.msra.mxu0 0.0
    %255 = vmatprep.subr.mxu0 0.0
    %256 = vmatpush1.msra.mxu0 0.0
    %257 = vmatprep.subr.mxu0 0.0
    %258 = vmatpush1.msra.mxu0 0.0
    %259 = vmatprep.subr.mxu0 0.0
    %260 = vmatpush1.msra.mxu0 0.0
    %261 = vmatprep.subr.mxu0 0.0
    %262 = vmatpush1.msra.mxu0 0.0
    %263 = vmatprep.subr.mxu0 0.0
    %264 = vmatpush1.msra.mxu0 0.0
    %265 = vmatprep.subr.mxu0 0.0
    %266 = vmatpush1.msra.mxu0 0.0
    %267 = vmatprep.mubr.f32.mxu0 0.0
    %268 = vmatmul.mubr.f32.gmra.mrb[0].mxu0 %v201
    %v269 = vpop.f32.mrb[0].mxu0
    %v270 = vadd.f32 0.0, %v269
    %v271 = vpop.f32.mrb[0].mxu0
    %272 = vdwg.mxu0
    %v273 = vmax.f32 %v270, 0.0
    %vm274 = vcmask 15360
    %v276 = vsel %vm274, %v273, 0
    %vm278 = vcmask 1041408
    %v280 = vsel %vm278, %v70, 0
    %282 = vmatprep.subr.mxu0 0.0
    %283 = vmatpush1.msra.mxu0 %v280
    %284 = vmatprep.subr.mxu0 0.0
    %285 = vmatpush1.msra.mxu0 0.0
    %286 = vmatprep.subr.mxu0 0.0
    %287 = vmatpush1.msra.mxu0 0.0
    %288 = vmatprep.subr.mxu0 0.0
    %289 = vmatpush1.msra.mxu0 0.0
    %290 = vmatprep.subr.mxu0 0.0
    %291 = vmatpush1.msra.mxu0 0.0
    %292 = vmatprep.subr.mxu0 0.0
    %293 = vmatpush1.msra.mxu0 0.0
    %294 = vmatprep.subr.mxu0 0.0
    %295 = vmatpush1.msra.mxu0 0.0
    %296 = vmatprep.subr.mxu0 0.0
    %297 = vmatpush1.msra.mxu0 0.0
    %298 = vmatprep.subr.mxu0 0.0
    %299 = vmatpush1.msra.mxu0 0.0
    %300 = vmatprep.subr.mxu0 0.0
    %301 = vmatpush1.msra.mxu0 0.0
    %302 = vmatprep.subr.mxu0 0.0
    %303 = vmatpush1.msra.mxu0 0.0
    %304 = vmatprep.subr.mxu0 0.0
    %305 = vmatpush1.msra.mxu0 0.0
    %306 = vmatprep.subr.mxu0 0.0
    %307 = vmatpush1.msra.mxu0 0.0
    %308 = vmatprep.subr.mxu0 0.0
    %309 = vmatpush1.msra.mxu0 0.0
    %310 = vmatprep.subr.mxu0 0.0
    %311 = vmatpush1.msra.mxu0 0.0
    %312 = vmatprep.subr.mxu0 0.0
    %313 = vmatpush1.msra.mxu0 0.0
    %314 = vmatprep.subr.mxu0 0.0
    %315 = vmatpush1.msra.mxu0 0.0
    %316 = vmatprep.subr.mxu0 0.0
    %317 = vmatpush1.msra.mxu0 0.0
    %318 = vmatprep.subr.mxu0 0.0
    %319 = vmatpush1.msra.mxu0 0.0
    %320 = vmatprep.subr.mxu0 0.0
    %321 = vmatpush1.msra.mxu0 0.0
    %322 = vmatprep.subr.mxu0 0.0
    %323 = vmatpush1.msra.mxu0 0.0
    %324 = vmatprep.subr.mxu0 0.0
    %325 = vmatpush1.msra.mxu0 0.0
    %326 = vmatprep.subr.mxu0 0.0
    %327 = vmatpush1.msra.mxu0 0.0
    %328 = vmatprep.subr.mxu0 0.0
    %329 = vmatpush1.msra.mxu0 0.0
    %330 = vmatprep.subr.mxu0 0.0
    %331 = vmatpush1.msra.mxu0 0.0
    %332 = vmatprep.subr.mxu0 0.0
    %333 = vmatpush1.msra.mxu0 0.0
    %334 = vmatprep.subr.mxu0 0.0
    %335 = vmatpush1.msra.mxu0 0.0
    %336 = vmatprep.subr.mxu0 0.0
    %337 = vmatpush1.msra.mxu0 0.0
    %338 = vmatprep.subr.mxu0 0.0
    %339 = vmatpush1.msra.mxu0 0.0
    %340 = vmatprep.subr.mxu0 0.0
    %341 = vmatpush1.msra.mxu0 0.0
    %342 = vmatprep.subr.mxu0 0.0
    %343 = vmatpush1.msra.mxu0 0.0
    %344 = vmatprep.subr.mxu0 0.0
    %345 = vmatpush1.msra.mxu0 0.0
    %346 = vmatprep.mubr.f32.mxu0 0.0
    %347 = vmatmul.mubr.f32.gmra.mrb[0].mxu0 %v276
    %v348 = vpop.f32.mrb[0].mxu0
    %v349 = vadd.f32 0.0, %v348
    %v350 = vpop.f32.mrb[0].mxu0
    %351 = vdwg.mxu0
    %v352 = vxor.u32 %v349, 2147483648
    %v353 = vmul.f32 %v352, 1.442695
    %v354 = vpow.pop %v353
    %v355 = vadd.f32 %v354, 1.0
    %v356 = vrcp.pop %v355
    %v357 = vmul.f32 1.0, %v356
    %v358 = vlaneseq
    %v359 = vshrl.u32 %v358, 7
    %v360 = vsub.s32 0, %v359
    %v361 = vrot.slane %v357, %v360
    %363 = vbcast.lane.b32.xlu0 %v361, 256
    %v364 = vpop.permute.xlu0 %363
    %s366 = sor.u32 256, 8
    %367 = vbcast.lane.b32.xlu0 %v361, %s366
    %v368 = vpop.permute.xlu0 %367
    %s370 = sor.u32 256, 16
    %371 = vbcast.lane.b32.xlu0 %v361, %s370
    %v372 = vpop.permute.xlu0 %371
    %s374 = sor.u32 256, 24
    %375 = vbcast.lane.b32.xlu0 %v361, %s374
    %v376 = vpop.permute.xlu0 %375
    %v377 = vlaneseq
    %v378 = vshrl.u32 %v377, 7
    %v379 = vsub.s32 1, %v378
    %v380 = vrot.slane %v357, %v379
    %382 = vbcast.lane.b32.xlu0 %v380, 256
    %v383 = vpop.permute.xlu0 %382
    %s385 = sor.u32 256, 8
    %386 = vbcast.lane.b32.xlu0 %v380, %s385
    %v387 = vpop.permute.xlu0 %386
    %s389 = sor.u32 256, 16
    %390 = vbcast.lane.b32.xlu0 %v380, %s389
    %v391 = vpop.permute.xlu0 %390
    %s393 = sor.u32 256, 24
    %394 = vbcast.lane.b32.xlu0 %v380, %s393
    %v395 = vpop.permute.xlu0 %394
    %v396 = vmul.f32 %v50, %v364
    %v397 = vmul.f32 %v51, %v364
    %v398 = vmul.f32 %v52, %v368
    %v399 = vmul.f32 %v53, %v368
    %v400 = vmul.f32 %v54, %v372
    %v401 = vmul.f32 %v55, %v372
    %v402 = vmul.f32 %v56, %v376
    %v403 = vmul.f32 %v57, %v376
    %v404 = vmul.f32 %v58, %v383
    %v405 = vmul.f32 %v59, %v383
    %v406 = vmul.f32 %v60, %v387
    %v407 = vmul.f32 %v61, %v387
    %v408 = vmul.f32 %v62, %v391
    %v409 = vmul.f32 %v63, %v391
    %v410 = vmul.f32 %v64, %v395
    %v411 = vmul.f32 %v65, %v395
    %v412 = vadd.f32 %v396, %v398
    %v413 = vadd.f32 %v412, %v400
    %v414 = vadd.f32 %v413, %v402
    %v415 = vrot.slane %v414, 4
    %v416 = vadd.f32 %v414, %v415
    %v417 = vrot.slane %v416, 2
    %v418 = vadd.f32 %v416, %v417
    %v419 = vrot.slane %v418, 1
    %v420 = vadd.f32 %v418, %v419
    %v421 = vadd.f32 %v397, %v399
    %v422 = vadd.f32 %v421, %v401
    %v423 = vadd.f32 %v422, %v403
    %v424 = vrot.slane %v423, 4
    %v425 = vadd.f32 %v423, %v424
    %v426 = vrot.slane %v425, 2
    %v427 = vadd.f32 %v425, %v426
    %v428 = vrot.slane %v427, 1
    %v429 = vadd.f32 %v427, %v428
    %v430 = vadd.f32 %v404, %v406
    %v431 = vadd.f32 %v430, %v408
    %v432 = vadd.f32 %v431, %v410
    %v433 = vrot.slane %v432, 4
    %v434 = vadd.f32 %v432, %v433
    %v435 = vrot.slane %v434, 2
    %v436 = vadd.f32 %v434, %v435
    %v437 = vrot.slane %v436, 1
    %v438 = vadd.f32 %v436, %v437
    %v439 = vadd.f32 %v405, %v407
    %v440 = vadd.f32 %v439, %v409
    %v441 = vadd.f32 %v440, %v411
    %v442 = vrot.slane %v441, 4
    %v443 = vadd.f32 %v441, %v442
    %v444 = vrot.slane %v443, 2
    %v445 = vadd.f32 %v443, %v444
    %v446 = vrot.slane %v445, 1
    %v447 = vadd.f32 %v445, %v446
    %v448 = vrcp.pop 32.0
    %v449 = vmul.f32 %v420, %v448
    %v450 = vmul.f32 %v429, %v448
    %v451 = vmul.f32 %v438, %v448
    %v452 = vmul.f32 %v447, %v448
    %v453 = vmax.f32 %v396, %v398
    %v454 = vmax.f32 %v453, %v400
    %v455 = vmax.f32 %v454, %v402
    %v456 = vrot.slane %v455, 4
    %v457 = vmax.f32 %v455, %v456
    %v458 = vrot.slane %v457, 2
    %v459 = vmax.f32 %v457, %v458
    %v460 = vrot.slane %v459, 1
    %v461 = vmax.f32 %v459, %v460
    %v462 = vmax.f32 %v397, %v399
    %v463 = vmax.f32 %v462, %v401
    %v464 = vmax.f32 %v463, %v403
    %v465 = vrot.slane %v464, 4
    %v466 = vmax.f32 %v464, %v465
    %v467 = vrot.slane %v466, 2
    %v468 = vmax.f32 %v466, %v467
    %v469 = vrot.slane %v468, 1
    %v470 = vmax.f32 %v468, %v469
    %v471 = vmax.f32 %v404, %v406
    %v472 = vmax.f32 %v471, %v408
    %v473 = vmax.f32 %v472, %v410
    %v474 = vrot.slane %v473, 4
    %v475 = vmax.f32 %v473, %v474
    %v476 = vrot.slane %v475, 2
    %v477 = vmax.f32 %v475, %v476
    %v478 = vrot.slane %v477, 1
    %v479 = vmax.f32 %v477, %v478
    %v480 = vmax.f32 %v405, %v407
    %v481 = vmax.f32 %v480, %v409
    %v482 = vmax.f32 %v481, %v411
    %v483 = vrot.slane %v482, 4
    %v484 = vmax.f32 %v482, %v483
    %v485 = vrot.slane %v484, 2
    %v486 = vmax.f32 %v484, %v485
    %v487 = vrot.slane %v486, 1
    %v488 = vmax.f32 %v486, %v487
    %v489 = vadd.f32 %v449, %v461
    %v490 = vadd.f32 %v450, %v470
    %v491 = vadd.f32 %v451, %v479
    %v492 = vadd.f32 %v452, %v488
    %v493 = vmul.f32 %v489, 0.5
    %v494 = vmul.f32 %v490, 0.5
    %v495 = vmul.f32 %v491, 0.5
    %v496 = vmul.f32 %v492, 0.5
    %v497 = vld [vmem:[#allocation6] sm:$0xff]
    %v498 = vld [vmem:[#allocation6 + $0x8] sm:$0xff]
    %v499 = vld [vmem:[#allocation6 + $0x10] sm:$0xff]
    %v500 = vld [vmem:[#allocation6 + $0x18] sm:$0xff]
    %v501 = vld [vmem:[#allocation6 + $0x20] sm:$0xff]
    %v502 = vld [vmem:[#allocation6 + $0x28] sm:$0xff]
    %v503 = vld [vmem:[#allocation6 + $0x30] sm:$0xff]
    %v504 = vld [vmem:[#allocation6 + $0x38] sm:$0xff]
    %v505 = vld [vmem:[#allocation6 + $0x40] sm:$0xff]
    %v506 = vld [vmem:[#allocation6 + $0x48] sm:$0xff]
    %v507 = vld [vmem:[#allocation6 + $0x50] sm:$0xff]
    %v508 = vld [vmem:[#allocation6 + $0x58] sm:$0xff]
    %v509 = vld [vmem:[#allocation6 + $0x60] sm:$0xff]
    %v510 = vld [vmem:[#allocation6 + $0x68] sm:$0xff]
    %v511 = vld [vmem:[#allocation6 + $0x70] sm:$0xff]
    %v512 = vld [vmem:[#allocation6 + $0x78] sm:$0xff]
    %v513 = vld [vmem:[#allocation6 + $0x80] sm:$0xff]
    %v514 = vld [vmem:[#allocation6 + $0x88] sm:$0xff]
    %v515 = vld [vmem:[#allocation6 + $0x90] sm:$0xff]
    %v516 = vld [vmem:[#allocation6 + $0x98] sm:$0xff]
    %v517 = vld [vmem:[#allocation6 + $0xa0] sm:$0xff]
    %v518 = vld [vmem:[#allocation6 + $0xa8] sm:$0xff]
    %v519 = vld [vmem:[#allocation6 + $0xb0] sm:$0xff]
    %v520 = vld [vmem:[#allocation6 + $0xb8] sm:$0xff]
    %v521 = vld [vmem:[#allocation6 + $0xc0] sm:$0xff]
    %v522 = vld [vmem:[#allocation6 + $0xc8] sm:$0xff]
    %v523 = vld [vmem:[#allocation6 + $0xd0] sm:$0xff]
    %v524 = vld [vmem:[#allocation6 + $0xd8] sm:$0xff]
    %v525 = vld [vmem:[#allocation6 + $0xe0] sm:$0xff]
    %v526 = vld [vmem:[#allocation6 + $0xe8] sm:$0xff]
    %v527 = vld [vmem:[#allocation6 + $0xf0] sm:$0xff]
    %v528 = vld [vmem:[#allocation6 + $0xf8] sm:$0xff]
    %v529 = vld [vmem:[#allocation6 + $0x100] sm:$0xff]
    %v530 = vld [vmem:[#allocation6 + $0x108] sm:$0xff]
    %v531 = vld [vmem:[#allocation6 + $0x110] sm:$0xff]
    %v532 = vld [vmem:[#allocation6 + $0x118] sm:$0xff]
    %v533 = vld [vmem:[#allocation6 + $0x120] sm:$0xff]
    %v534 = vld [vmem:[#allocation6 + $0x128] sm:$0xff]
    %v535 = vld [vmem:[#allocation6 + $0x130] sm:$0xff]
    %v536 = vld [vmem:[#allocation6 + $0x138] sm:$0xff]
    %v537 = vld [vmem:[#allocation6 + $0x140] sm:$0xff]
    %v538 = vld [vmem:[#allocation6 + $0x148] sm:$0xff]
    %v539 = vld [vmem:[#allocation6 + $0x150] sm:$0xff]
    %v540 = vld [vmem:[#allocation6 + $0x158] sm:$0xff]
    %v541 = vld [vmem:[#allocation6 + $0x160] sm:$0xff]
    %v542 = vld [vmem:[#allocation6 + $0x168] sm:$0xff]
    %v543 = vld [vmem:[#allocation6 + $0x170] sm:$0xff]
    %v544 = vld [vmem:[#allocation6 + $0x178] sm:$0xff]
    %v545 = vld [vmem:[#allocation6 + $0x180] sm:$0xff]
    %v546 = vld [vmem:[#allocation6 + $0x188] sm:$0xff]
    %v547 = vld [vmem:[#allocation6 + $0x190] sm:$0xff]
    %v548 = vld [vmem:[#allocation6 + $0x198] sm:$0xff]
    %v549 = vld [vmem:[#allocation6 + $0x1a0] sm:$0xff]
    %v550 = vld [vmem:[#allocation6 + $0x1a8] sm:$0xff]
    %v551 = vld [vmem:[#allocation6 + $0x1b0] sm:$0xff]
    %v552 = vld [vmem:[#allocation6 + $0x1b8] sm:$0xff]
    %v553 = vld [vmem:[#allocation6 + $0x1c0] sm:$0xff]
    %v554 = vld [vmem:[#allocation6 + $0x1c8] sm:$0xff]
    %v555 = vld [vmem:[#allocation6 + $0x1d0] sm:$0xff]
    %v556 = vld [vmem:[#allocation6 + $0x1d8] sm:$0xff]
    %v557 = vld [vmem:[#allocation6 + $0x1e0] sm:$0xff]
    %v558 = vld [vmem:[#allocation6 + $0x1e8] sm:$0xff]
    %v559 = vld [vmem:[#allocation6 + $0x1f0] sm:$0xff]
    %v560 = vld [vmem:[#allocation6 + $0x1f8] sm:$0xff]
    %s561 = sld [smem:[#allocation2]]
    %v562 = vstv %s561
    %v567 = vsel %vm198, %v495, %v493
    %v568 = vsel %vm198, %v496, %v494
    %571 = vmatprep.subr.mxu0 %v498
    %572 = vmatpush1.msra.mxu0 %v497
    %573 = vmatprep.subr.mxu0 %v500
    %574 = vmatpush1.msra.mxu0 %v499
    %575 = vmatprep.subr.mxu0 %v502
    %576 = vmatpush1.msra.mxu0 %v501
    %577 = vmatprep.subr.mxu0 %v504
    %578 = vmatpush1.msra.mxu0 %v503
    %579 = vmatprep.subr.mxu0 %v506
    %580 = vmatpush1.msra.mxu0 %v505
    %581 = vmatprep.subr.mxu0 %v508
    %582 = vmatpush1.msra.mxu0 %v507
    %583 = vmatprep.subr.mxu0 %v510
    %584 = vmatpush1.msra.mxu0 %v509
    %585 = vmatprep.subr.mxu0 %v512
    %586 = vmatpush1.msra.mxu0 %v511
    %587 = vmatprep.subr.mxu0 %v514
    %588 = vmatpush1.msra.mxu0 %v513
    %589 = vmatprep.subr.mxu0 %v516
    %590 = vmatpush1.msra.mxu0 %v515
    %591 = vmatprep.subr.mxu0 %v518
    %592 = vmatpush1.msra.mxu0 %v517
    %593 = vmatprep.subr.mxu0 %v520
    %594 = vmatpush1.msra.mxu0 %v519
    %595 = vmatprep.subr.mxu0 %v522
    %596 = vmatpush1.msra.mxu0 %v521
    %597 = vmatprep.subr.mxu0 %v524
    %598 = vmatpush1.msra.mxu0 %v523
    %599 = vmatprep.subr.mxu0 %v526
    %600 = vmatpush1.msra.mxu0 %v525
    %601 = vmatprep.subr.mxu0 %v528
    %602 = vmatpush1.msra.mxu0 %v527
    %603 = vmatprep.subr.mxu0 %v530
    %604 = vmatpush1.msra.mxu0 %v529
    %605 = vmatprep.subr.mxu0 %v532
    %606 = vmatpush1.msra.mxu0 %v531
    %607 = vmatprep.subr.mxu0 %v534
    %608 = vmatpush1.msra.mxu0 %v533
    %609 = vmatprep.subr.mxu0 %v536
    %610 = vmatpush1.msra.mxu0 %v535
    %611 = vmatprep.subr.mxu0 %v538
    %612 = vmatpush1.msra.mxu0 %v537
    %613 = vmatprep.subr.mxu0 %v540
    %614 = vmatpush1.msra.mxu0 %v539
    %615 = vmatprep.subr.mxu0 %v542
    %616 = vmatpush1.msra.mxu0 %v541
    %617 = vmatprep.subr.mxu0 %v544
    %618 = vmatpush1.msra.mxu0 %v543
    %619 = vmatprep.subr.mxu0 %v546
    %620 = vmatpush1.msra.mxu0 %v545
    %621 = vmatprep.subr.mxu0 %v548
    %622 = vmatpush1.msra.mxu0 %v547
    %623 = vmatprep.subr.mxu0 %v550
    %624 = vmatpush1.msra.mxu0 %v549
    %625 = vmatprep.subr.mxu0 %v552
    %626 = vmatpush1.msra.mxu0 %v551
    %627 = vmatprep.subr.mxu0 %v554
    %628 = vmatpush1.msra.mxu0 %v553
    %629 = vmatprep.subr.mxu0 %v556
    %630 = vmatpush1.msra.mxu0 %v555
    %631 = vmatprep.subr.mxu0 %v558
    %632 = vmatpush1.msra.mxu0 %v557
    %633 = vmatprep.subr.mxu0 %v560
    %634 = vmatpush1.msra.mxu0 %v559
    %635 = vmatprep.mubr.f32.mxu0 %v568
    %636 = vmatmul.mubr.f32.gmra.mrb[0].mxu0 %v567
    %v637 = vpop.f32.mrb[0].mxu0
    %v638 = vadd.f32 %v562, %v637
    %v639 = vpop.f32.mrb[0].mxu0
    %v640 = vadd.f32 %v562, %v639
    %641 = vdwg.mxu0
    %v642 = vxor.u32 %v638, 2147483648
    %v643 = vxor.u32 %v640, 2147483648
    %v644 = vmul.f32 %v642, 1.442695
    %v645 = vpow.pop %v644
    %v646 = vmul.f32 %v643, 1.442695
    %v647 = vpow.pop %v646
    %v648 = vadd.f32 %v645, 1.0
    %v649 = vadd.f32 %v647, 1.0
    %v650 = vrcp.pop %v648
    %v651 = vmul.f32 1.0, %v650
    %v652 = vrcp.pop %v649
    %v653 = vmul.f32 1.0, %v652
    %v656 = vcombine.low %v651, %v653
    %v658 = vunpack.c.l.s4 1966171168
    %v659 = vunpack.c.0.s8 %v658
    %v660 = vlaneseq
    %v661 = vshrl.u32 %v660, 7
    %v662 = vsub.s32 %v659, %v661
    %v663 = vrot.slane %v656, %v662
    %v664 = vcombine.high %v663, %v663
    %v666 = vunpack.c.l.s4 1966171168
    %v667 = vunpack.c.0.s8 %v666
    %v668 = vlaneseq
    %v669 = vshrl.u32 %v668, 7
    %v670 = vsub.s32 %v667, %v669
    %v671 = vrot.slane %v663, %v670
    %v673 = vunpack.c.l.s4 1966171168
    %v674 = vunpack.c.0.s8 %v673
    %v675 = vlaneseq
    %v676 = vshrl.u32 %v675, 7
    %v677 = vsub.s32 %v674, %v676
    %v678 = vrot.slane %v664, %v677
    %v679 = vlaneseq
    %v680 = vshrl.u32 %v679, 7
    %v681 = vsub.s32 0, %v680
    %v682 = vrot.slane %v671, %v681
    %v683 = vlaneseq
    %v684 = vshrl.u32 %v683, 7
    %v685 = vsub.s32 1, %v684
    %v686 = vrot.slane %v671, %v685
    %v687 = vlaneseq
    %v688 = vshrl.u32 %v687, 7
    %v689 = vsub.s32 0, %v688
    %v690 = vrot.slane %v678, %v689
    %v691 = vlaneseq
    %v692 = vshrl.u32 %v691, 7
    %v693 = vsub.s32 1, %v692
    %v694 = vrot.slane %v678, %v693
    %v699 = vmul.f32 %v396, %v682
    %v700 = vmul.f32 %v397, %v686
    %v701 = vmul.f32 %v398, %v682
    %v702 = vmul.f32 %v399, %v686
    %v703 = vmul.f32 %v400, %v682
    %v704 = vmul.f32 %v401, %v686
    %v705 = vmul.f32 %v402, %v682
    %v706 = vmul.f32 %v403, %v686
    %v707 = vmul.f32 %v404, %v690
    %v708 = vmul.f32 %v405, %v694
    %v709 = vmul.f32 %v406, %v690
    %v710 = vmul.f32 %v407, %v694
    %v711 = vmul.f32 %v408, %v690
    %v712 = vmul.f32 %v409, %v694
    %v713 = vmul.f32 %v410, %v690
    %v714 = vmul.f32 %v411, %v694
    %715 = vst [vmem:[#allocation8] sm:$0xff] %v699
    %716 = vst [vmem:[#allocation8 + $0x8] sm:$0xff] %v700
    %717 = vst [vmem:[#allocation8 + $0x10] sm:$0xff] %v701
    %718 = vst [vmem:[#allocation8 + $0x18] sm:$0xff] %v702
    %719 = vst [vmem:[#allocation8 + $0x20] sm:$0xff] %v703
    %720 = vst [vmem:[#allocation8 + $0x28] sm:$0xff] %v704
    %721 = vst [vmem:[#allocation8 + $0x30] sm:$0xff] %v705
    %722 = vst [vmem:[#allocation8 + $0x38] sm:$0xff] %v706
    %723 = vst [vmem:[#allocation8 + $0x40] sm:$0xff] %v707
    %724 = vst [vmem:[#allocation8 + $0x48] sm:$0xff] %v708
    %725 = vst [vmem:[#allocation8 + $0x50] sm:$0xff] %v709
    %726 = vst [vmem:[#allocation8 + $0x58] sm:$0xff] %v710
    %727 = vst [vmem:[#allocation8 + $0x60] sm:$0xff] %v711
    %728 = vst [vmem:[#allocation8 + $0x68] sm:$0xff] %v712
    %729 = vst [vmem:[#allocation8 + $0x70] sm:$0xff] %v713
    %730 = vst [vmem:[#allocation8 + $0x78] sm:$0xff] %v714
    // Predicated region
    $region30: #{tpu_custom_call.1} parent=1 // pred_check
      _
    $region31: #{tpu_custom_call.1} parent=1 // pred_check_branch
      %732 = sbr.rel (0) target = $region33
    $region32: #{tpu_custom_call.1} parent=1 // pred_region
      %s734 = ssub.s32 2048, 2048
      %735 = vsyncadd [#allocation5], %s734
      %s736 = sshll.u32 [#allocation8], 4
      %s737 = int_to_ptr.vmem [resolvable:$true] %s736
      %742 = dma.vmem_to_hbm [thread:$0]  %s737, 2048, %s5, [#allocation5], 256, 256, 16
    $region33: #{tpu_custom_call.1} parent=1 // pred_fallthru
      _
    // Predicated region
    $region34: #{tpu_custom_call.1} parent=1 // pred_check
      _
    $region35: #{tpu_custom_call.1} parent=1 // pred_check_branch
      %744 = sbr.rel (0) target = $region37
    $region36: #{tpu_custom_call.1} parent=1 // pred_region
      %745 = dma.done [#allocation5], 2048
    $region37: #{tpu_custom_call.1} parent=1 // pred_fallthru
      _
    %746 = vsyncpa [#allocation4], 1
    %747 = vsyncpa [#allocation7], 1
    %748 = vsyncpa [#allocation5], 1

</llo_original>
